<compile_context>
chip_gen: v7x
topology: tpu7x:2x2x1
jax: 0.10.0
libtpu: 0.0.40
codegen_flags: <defaults>
</compile_context>

<pallas_src>
from functools import partial

import jax
import jax.numpy as jnp
from jax.experimental import pallas as pl
from jax.experimental.pallas import tpu as pltpu

HIDDEN = 512
LANE = 128
HID_CHUNK = 256  # hidden-dim chunk for the fused layer1->ReLU->layer2 pipeline


def _round_up(n, m):
    return ((n + m - 1) // m) * m


def _cdiv(a, b):
    return (a + b - 1) // b


def _default_batch_tile():
    # v5e: smaller tile (1 vector-store slot, spill pressure); v6e/v7x: 256.
    try:
        kind = jax.devices()[0].device_kind.lower()
        if ("v5 lite" in kind) or ("v5e" in kind) or ("v5lite" in kind):
            return 128
    except Exception:
        pass
    return 256


def _choose_batch_tiling(batch, batch_tile):
    """Pick (TB, n_tiles) with TB a multiple of 16, tiles ~evenly sized, and
    >=2 tiles whenever the batch allows (feeds both v7x cores + pipelining)."""
    b16 = _round_up(max(batch, 1), 16)
    min_tiles = 2 if b16 >= 32 else 1
    n_tiles = max(_cdiv(b16, batch_tile), min_tiles)
    tb = _round_up(_cdiv(b16, n_tiles), 16)
    n_tiles = max(_cdiv(b16, tb), 1)
    return tb, n_tiles


def _encoder_kernel(x_ref, w1_ref, b1_ref, w2_ref, b2_ref, o_ref, *, hid_chunk):
    # x tile arrives in f32; cast to the weight dtype (bf16) in-kernel so the
    # wrapper never spends an extra HBM pass on it.
    x = x_ref[...].astype(w1_ref.dtype)

    acc = jnp.zeros(o_ref.shape, jnp.float32)
    n_chunks = w1_ref.shape[1] // hid_chunk
    for c in range(n_chunks):  # static unroll (2 chunks for HIDDEN=512)
        w1c = w1_ref[:, pl.ds(c * hid_chunk, hid_chunk)]       # (D_pad, chunk) bf16
        b1c = b1_ref[:, pl.ds(c * hid_chunk, hid_chunk)]       # (1, chunk)     f32
        # Layer 1 chunk: MXU matmul with f32 accumulation, fused bias + ReLU (VPU).
        h = jnp.dot(x, w1c, preferred_element_type=jnp.float32)
        h = jnp.maximum(h + b1c, 0.0)
        # Layer 2 partial: downcast activations to bf16 for MXU, accumulate in f32.
        w2c = w2_ref[pl.ds(c * hid_chunk, hid_chunk), :]        # (chunk, L_pad) bf16
        acc = acc + jnp.dot(h.astype(w2_ref.dtype), w2c,
                            preferred_element_type=jnp.float32)

    o_ref[...] = (acc + b2_ref[...]).astype(o_ref.dtype)


def prepare_params(w1, b1, w2, b2, *, compute_dtype=jnp.bfloat16):
    """One-time (off the hot path) pad + cast of the encoder parameters.

    w1: [D_in, 512], b1: [512] or [1,512], w2: [512, L], b2: [L] or [1,L].
    """
    d_in, h = w1.shape
    h2, latent = w2.shape
    assert h == HIDDEN and h2 == HIDDEN, (h, h2)

    d_pad = _round_up(d_in, LANE)   # lane-dense contraction dim (exact: zero pad)
    l_pad = _round_up(latent, LANE)  # lane-dense output dim

    w1_p = jnp.pad(w1, ((0, d_pad - d_in), (0, 0))).astype(compute_dtype)
    w2_p = jnp.pad(w2, ((0, 0), (0, l_pad - latent))).astype(compute_dtype)
    b1_p = b1.astype(jnp.float32).reshape(1, HIDDEN)
    b2_p = jnp.pad(b2.astype(jnp.float32).reshape(1, latent),
                   ((0, 0), (0, l_pad - latent)))
    return {"w1": w1_p, "b1": b1_p, "w2": w2_p, "b2": b2_p,
            "d_in": d_in, "latent": latent}


def autoencoder_forward(x, params, *, batch_tile=None, out_dtype=jnp.float32):
    """x: [B, D_in] f32.  Returns [B, latent] in out_dtype (f32 by default)."""
    w1, b1, w2, b2 = params["w1"], params["b1"], params["w2"], params["b2"]
    d_in, latent = params["d_in"], params["latent"]
    B, d_x = x.shape
    assert d_x == d_in, (d_x, d_in)

    d_pad, H = w1.shape
    l_pad = w2.shape[1]
    hid_chunk = min(HID_CHUNK, H)
    assert H % hid_chunk == 0

    if batch_tile is None:
        batch_tile = _default_batch_tile()
    TB, n_tiles = _choose_batch_tiling(B, batch_tile)
    B_pad = TB * n_tiles

    # Zero-pad batch rows and contraction columns (single fused pad, stays f32;
    # the bf16 cast happens inside the kernel).
    if (B_pad != B) or (d_pad != d_in):
        x = jnp.pad(x, ((0, B_pad - B), (0, d_pad - d_in)))
    x = x.astype(jnp.float32)

    # VMEM footprint: resident weights/biases + double-buffered x/out tiles.
    wsize = jnp.dtype(w1.dtype).itemsize
    osize = jnp.dtype(out_dtype).itemsize
    resident = d_pad * H * wsize + H * l_pad * wsize + (H + l_pad) * 4
    per_tile = 2 * (TB * d_pad * 4 + TB * l_pad * osize)
    vmem_limit = int(min(max(2 * (resident + per_tile) + (8 << 20), 16 << 20),
                         64 << 20))

    flops = 2 * B_pad * (d_pad * H + H * l_pad)
    bytes_accessed = (B_pad * d_pad * 4          # x (f32 read)
                      + d_pad * H * wsize        # W1
                      + H * l_pad * wsize        # W2
                      + (H + l_pad) * 4          # biases
                      + B_pad * l_pad * osize)   # output

    out_padded = pl.pallas_call(
        partial(_encoder_kernel, hid_chunk=hid_chunk),
        out_shape=jax.ShapeDtypeStruct((B_pad, l_pad), out_dtype),
        grid=(n_tiles,),
        in_specs=[
            pl.BlockSpec((TB, d_pad), lambda i: (i, 0)),     # x tile marches over batch
            pl.BlockSpec((d_pad, H), lambda i: (0, 0)),      # W1 resident
            pl.BlockSpec((1, H), lambda i: (0, 0)),          # b1 resident
            pl.BlockSpec((H, l_pad), lambda i: (0, 0)),      # W2 resident (padded cols)
            pl.BlockSpec((1, l_pad), lambda i: (0, 0)),      # b2 resident (padded)
        ],
        out_specs=pl.BlockSpec((TB, l_pad), lambda i: (i, 0)),
        compiler_params=pltpu.CompilerParams(
            dimension_semantics=("parallel",),               # megacore sharding on v7x
            vmem_limit_bytes=vmem_limit),
        cost_estimate=pl.CostEstimate(
            flops=flops, transcendentals=0, bytes_accessed=bytes_accessed),
    )(x, w1, b1, w2, b2)

    return out_padded[:B, :latent]


def _reference_matched(x, w1, b1, w2, b2):
    # Matches kernel numerics: bf16 matmul inputs, f32 accumulation, f32 bias/ReLU.
    h = jnp.dot(x.astype(jnp.bfloat16), w1.astype(jnp.bfloat16),
                preferred_element_type=jnp.float32) + b1.reshape(1, -1)
    h = jnp.maximum(h, 0.0)
    return jnp.dot(h.astype(jnp.bfloat16), w2.astype(jnp.bfloat16),
                   preferred_element_type=jnp.float32) + b2.reshape(1, -1)


def _reference_f32(x, w1, b1, w2, b2):
    h = jnp.maximum(x @ w1 + b1.reshape(1, -1), 0.0)
    return h @ w2 + b2.reshape(1, -1)


if __name__ == "__main__":
    latent_dim = 10
    input_dim = 64        # small synthetic input_dim
    batch = 8

    key = jax.random.PRNGKey(0)
    kx, k1, k2, k3, k4 = jax.random.split(key, 5)

    x = jax.random.normal(kx, (batch, input_dim), dtype=jnp.float32)
    # Deterministic param init (roughly PyTorch Linear scale: U(-1/sqrt(fan_in), 1/sqrt(fan_in)))
    bound1 = 1.0 / (input_dim ** 0.5)
    bound2 = 1.0 / (HIDDEN ** 0.5)
    w1 = jax.random.uniform(k1, (input_dim, HIDDEN), jnp.float32, -bound1, bound1)
    b1 = jax.random.uniform(k2, (HIDDEN,), jnp.float32, -bound1, bound1)
    w2 = jax.random.uniform(k3, (HIDDEN, latent_dim), jnp.float32, -bound2, bound2)
    b2 = jax.random.uniform(k4, (latent_dim,), jnp.float32, -bound2, bound2)

    # One-time parameter prep (pad + bf16 cast) — off the per-step hot path.
    params = prepare_params(w1, b1, w2, b2)

    out = jax.block_until_ready(autoencoder_forward(x, params))

    ref_matched = _reference_matched(x, w1, b1, w2, b2)
    ref_f32 = _reference_f32(x, w1, b1, w2, b2)

    assert out.shape == (batch, latent_dim), out.shape
    # Tight check vs. a reference with identical (bf16-in / f32-acc) numerics.
    assert jnp.allclose(out, ref_matched, atol=3e-3, rtol=3e-3), \
        "mismatch vs matched-precision reference"
    # Loose sanity check vs. the pure-f32 reference (bf16 inputs change numerics slightly).
    assert jnp.allclose(out, ref_f32, atol=5e-2, rtol=5e-2), "mismatch vs f32 reference"
    print("KERNEL_OK")
</pallas_src>

<mosaic_0001>
module attributes {stable_mosaic.version = 11 : i64} {
  func.func @_encoder_kernel(%arg0: i32, %arg1: memref<16x128xf32, #tpu.memory_space<vmem>>, %arg2: memref<128x512xbf16, #tpu.memory_space<vmem>>, %arg3: memref<1x512xf32, #tpu.memory_space<vmem>>, %arg4: memref<512x128xbf16, #tpu.memory_space<vmem>>, %arg5: memref<1x128xf32, #tpu.memory_space<vmem>>, %arg6: memref<16x128xf32, #tpu.memory_space<vmem>>) attributes {dimension_semantics = [#tpu.dimension_semantics<parallel>], iteration_bounds = array<i64: 1>, scalar_prefetch = 0 : i64, scratch_operands = 0 : i64, tpu.core_type = #tpu.core_type<tc>, window_params = [{transform_indices = @transform_0, window_bounds = array<i64: 16, 128>}, {pipeline_mode = #tpu.pipeline_mode<synchronous>, transform_indices = @transform_1, window_bounds = array<i64: 128, 512>}, {pipeline_mode = #tpu.pipeline_mode<synchronous>, transform_indices = @transform_2, window_bounds = array<i64: 1, 512>}, {pipeline_mode = #tpu.pipeline_mode<synchronous>, transform_indices = @transform_3, window_bounds = array<i64: 512, 128>}, {pipeline_mode = #tpu.pipeline_mode<synchronous>, transform_indices = @transform_4, window_bounds = array<i64: 1, 128>}, {transform_indices = @transform_5, window_bounds = array<i64: 16, 128>}]} {
    %c0 = arith.constant 0 : index
    %c0_0 = arith.constant 0 : index
    %0 = vector.load %arg1[%c0, %c0_0] : memref<16x128xf32, #tpu.memory_space<vmem>>, vector<16x128xf32>
    %1 = arith.truncf %0 : vector<16x128xf32> to vector<16x128xbf16>
    %cst = arith.constant 0.000000e+00 : f32
    %2 = vector.broadcast %cst : f32 to vector<16x128xf32>
    %c0_1 = arith.constant 0 : index
    %c0_2 = arith.constant 0 : index
    %3 = vector.load %arg2[%c0_1, %c0_2] : memref<128x512xbf16, #tpu.memory_space<vmem>>, vector<128x256xbf16>
    %c0_3 = arith.constant 0 : index
    %c0_4 = arith.constant 0 : index
    %4 = vector.load %arg3[%c0_3, %c0_4] : memref<1x512xf32, #tpu.memory_space<vmem>>, vector<1x256xf32>
    %cst_5 = arith.constant dense<0.000000e+00> : vector<16x256xf32>
    %5 = tpu.matmul %1, %3, %cst_5 {dimension_numbers = #tpu.dot_dimension_numbers<[1], [0], [0], [1], [0, 0, 1, 1], [], []>} : vector<16x128xbf16>, vector<128x256xbf16>, vector<16x256xf32> -> vector<16x256xf32>
    %6 = vector.broadcast %4 : vector<1x256xf32> to vector<16x256xf32>
    %7 = arith.addf %5, %6 : vector<16x256xf32>
    %cst_6 = arith.constant 0.000000e+00 : f32
    %8 = vector.broadcast %cst_6 : f32 to vector<16x256xf32>
    %9 = arith.maximumf %7, %8 : vector<16x256xf32>
    %c0_7 = arith.constant 0 : index
    %c0_8 = arith.constant 0 : index
    %10 = vector.load %arg4[%c0_7, %c0_8] : memref<512x128xbf16, #tpu.memory_space<vmem>>, vector<256x128xbf16>
    %11 = arith.truncf %9 : vector<16x256xf32> to vector<16x256xbf16>
    %cst_9 = arith.constant dense<0.000000e+00> : vector<16x128xf32>
    %12 = tpu.matmul %11, %10, %cst_9 {dimension_numbers = #tpu.dot_dimension_numbers<[1], [0], [0], [1], [0, 0, 1, 1], [], []>} : vector<16x256xbf16>, vector<256x128xbf16>, vector<16x128xf32> -> vector<16x128xf32>
    %13 = arith.addf %2, %12 : vector<16x128xf32>
    %c0_10 = arith.constant 0 : index
    %c256 = arith.constant 256 : index
    %14 = vector.load %arg2[%c0_10, %c256] : memref<128x512xbf16, #tpu.memory_space<vmem>>, vector<128x256xbf16>
    %c0_11 = arith.constant 0 : index
    %c256_12 = arith.constant 256 : index
    %15 = vector.load %arg3[%c0_11, %c256_12] : memref<1x512xf32, #tpu.memory_space<vmem>>, vector<1x256xf32>
    %cst_13 = arith.constant dense<0.000000e+00> : vector<16x256xf32>
    %16 = tpu.matmul %1, %14, %cst_13 {dimension_numbers = #tpu.dot_dimension_numbers<[1], [0], [0], [1], [0, 0, 1, 1], [], []>} : vector<16x128xbf16>, vector<128x256xbf16>, vector<16x256xf32> -> vector<16x256xf32>
    %17 = vector.broadcast %15 : vector<1x256xf32> to vector<16x256xf32>
    %18 = arith.addf %16, %17 : vector<16x256xf32>
    %cst_14 = arith.constant 0.000000e+00 : f32
    %19 = vector.broadcast %cst_14 : f32 to vector<16x256xf32>
    %20 = arith.maximumf %18, %19 : vector<16x256xf32>
    %c256_15 = arith.constant 256 : index
    %c0_16 = arith.constant 0 : index
    %21 = vector.load %arg4[%c256_15, %c0_16] : memref<512x128xbf16, #tpu.memory_space<vmem>>, vector<256x128xbf16>
    %22 = arith.truncf %20 : vector<16x256xf32> to vector<16x256xbf16>
    %cst_17 = arith.constant dense<0.000000e+00> : vector<16x128xf32>
    %23 = tpu.matmul %22, %21, %cst_17 {dimension_numbers = #tpu.dot_dimension_numbers<[1], [0], [0], [1], [0, 0, 1, 1], [], []>} : vector<16x256xbf16>, vector<256x128xbf16>, vector<16x128xf32> -> vector<16x128xf32>
    %24 = arith.addf %13, %23 : vector<16x128xf32>
    %c0_18 = arith.constant 0 : index
    %c0_19 = arith.constant 0 : index
    %25 = vector.load %arg5[%c0_18, %c0_19] : memref<1x128xf32, #tpu.memory_space<vmem>>, vector<1x128xf32>
    %26 = vector.broadcast %25 : vector<1x128xf32> to vector<16x128xf32>
    %27 = arith.addf %24, %26 : vector<16x128xf32>
    %c0_20 = arith.constant 0 : index
    %c0_21 = arith.constant 0 : index
    %28 = vector.load %arg6[%c0_20, %c0_21] : memref<16x128xf32, #tpu.memory_space<vmem>>, vector<16x128xf32>
    tpu.vector_store %arg6[%c0_20, %c0_21], %27 {strides = array<i32>} : memref<16x128xf32, #tpu.memory_space<vmem>>, vector<16x128xf32>,
    return
  }
  func.func @transform_0(%arg0: i32) -> (i32, i32) {
    %c0_i32 = arith.constant 0 : i32
    %c0_i32_0 = arith.constant 0 : i32
    return %arg0, %c0_i32 : i32, i32
  }
  func.func @transform_1(%arg0: i32) -> (i32, i32) {
    %c0_i32 = arith.constant 0 : i32
    %c0_i32_0 = arith.constant 0 : i32
    %c0_i32_1 = arith.constant 0 : i32
    return %c0_i32, %c0_i32_0 : i32, i32
  }
  func.func @transform_2(%arg0: i32) -> (i32, i32) {
    %c0_i32 = arith.constant 0 : i32
    %c0_i32_0 = arith.constant 0 : i32
    %c0_i32_1 = arith.constant 0 : i32
    return %c0_i32, %c0_i32_0 : i32, i32
  }
  func.func @transform_3(%arg0: i32) -> (i32, i32) {
    %c0_i32 = arith.constant 0 : i32
    %c0_i32_0 = arith.constant 0 : i32
    %c0_i32_1 = arith.constant 0 : i32
    return %c0_i32, %c0_i32_0 : i32, i32
  }
  func.func @transform_4(%arg0: i32) -> (i32, i32) {
    %c0_i32 = arith.constant 0 : i32
    %c0_i32_0 = arith.constant 0 : i32
    %c0_i32_1 = arith.constant 0 : i32
    return %c0_i32, %c0_i32_0 : i32, i32
  }
  func.func @transform_5(%arg0: i32) -> (i32, i32) {
    %c0_i32 = arith.constant 0 : i32
    %c0_i32_0 = arith.constant 0 : i32
    return %arg0, %c0_i32 : i32, i32
  }
}

</mosaic_0001>

<llo_original>
// kernel: tpu_custom_call.1
$region0: #{tpu_custom_call.1}
  #allocation0 [shape = 'u32[]', space=smem, size = 0x4, offset = 0x4, fixed_abs, tag = 'smem constant byte address 0x4 - core index']
  #allocation1 [shape = 'u32[144,128]{1,0:T(1,128)}', space=vmem, size = 0x12000, scoped, tag = 'internal scratch']
  %s0 = inlined_call_operand.hbm [shape: f32[16,128], index: 0, kind: input, shape index: {}]
  %s1 = inlined_call_operand.hbm [shape: bf16[128,512], index: 1, kind: input, shape index: {}]
  %s2 = inlined_call_operand.vmem [shape: f32[1,512], index: 2, kind: input, shape index: {}]
  %s3 = inlined_call_operand.hbm [shape: bf16[512,128], index: 3, kind: input, shape index: {}]
  %s4 = inlined_call_operand.vmem [shape: f32[1,128], index: 4, kind: input, shape index: {}]
  %s5 = inlined_call_operand.hbm [shape: f32[16,128], index: 5, kind: output, shape index: {}]
  %s6 = sld [smem:[#allocation0]]
  $region42: #{tpu_custom_call.1} parent=0
    _
  %s8 = ssub.s32 1, %s6
  %s9 = scalar_select 0, %s8, %s6
  $region1: #{tpu_custom_call.1} parent=0
    #allocation2 [shape = 'u8[8192]{0}', space=vmem, size = 0x2000, scoped, tag = 'input window, operand 0, single buffered']
    #allocation3 [shape = 's32[1]{0}', space=sflag, size = 0x4, scoped, tag = 'scoped memory for tpu_custom_call.1']
    #allocation4 [shape = 's32[1]{0}', space=sflag, size = 0x4, scoped, tag = 'scoped memory for tpu_custom_call.1']
    #allocation5 [shape = 'u8[131072]{0}', space=vmem, size = 0x20000, scoped, tag = 'input window, operand 1, single buffered']
    #allocation6 [shape = 's32[1]{0}', space=sflag, size = 0x4, scoped, tag = 'scoped memory for tpu_custom_call.1']
    #allocation7 [shape = 'u8[131072]{0}', space=vmem, size = 0x20000, scoped, tag = 'input window, operand 3, single buffered']
    #allocation8 [shape = 'u8[8192]{0}', space=vmem, size = 0x2000, scoped, tag = 'output window, operand 0, single buffered']
    %10 = vsyncpa [#allocation3], 0
    %11 = vsyncpa [#allocation6], 0
    %12 = vsyncpa [#allocation4], 0
    // Predicated region
    $region2: #{tpu_custom_call.1} parent=1 // pred_check
      _
    $region3: #{tpu_custom_call.1} parent=1 // pred_check_branch
      %14 = sbr.rel (0) target = $region5
    $region4: #{tpu_custom_call.1} parent=1 // pred_region
      %s16 = ssub.s32 256, 256
      %17 = vsyncadd [#allocation3], %s16
      %s18 = sshll.u32 [#allocation2], 4
      %s19 = int_to_ptr.vmem [resolvable:$true] %s18
      %24 = dma.hbm_to_vmem [thread:$0]  %s0, 256, %s19, [#allocation3], 128, 128, 8
    $region5: #{tpu_custom_call.1} parent=1 // pred_fallthru
      _
    // Predicated region
    $region6: #{tpu_custom_call.1} parent=1 // pred_check
      _
    $region7: #{tpu_custom_call.1} parent=1 // pred_check_branch
      %26 = sbr.rel (0) target = $region9
    $region8: #{tpu_custom_call.1} parent=1 // pred_region
      %s28 = ssub.s32 4096, 4096
      %29 = vsyncadd [#allocation6], %s28
      %s30 = sshll.u32 [#allocation5], 4
      %s31 = int_to_ptr.vmem [resolvable:$true] %s30
      %36 = dma.hbm_to_vmem [thread:$0]  %s1, 4096, %s31, [#allocation6], 256, 256, 16
    $region9: #{tpu_custom_call.1} parent=1 // pred_fallthru
      _
    // Predicated region
    $region10: #{tpu_custom_call.1} parent=1 // pred_check
      _
    $region11: #{tpu_custom_call.1} parent=1 // pred_check_branch
      %38 = sbr.rel (0) target = $region13
    $region12: #{tpu_custom_call.1} parent=1 // pred_region
      _
    $region13: #{tpu_custom_call.1} parent=1 // pred_fallthru
      _
    // Predicated region
    $region14: #{tpu_custom_call.1} parent=1 // pred_check
      _
    $region15: #{tpu_custom_call.1} parent=1 // pred_check_branch
      %40 = sbr.rel (0) target = $region17
    $region16: #{tpu_custom_call.1} parent=1 // pred_region
      %s42 = ssub.s32 4096, 4096
      %43 = vsyncadd [#allocation6], %s42
      %s44 = sshll.u32 [#allocation7], 4
      %s45 = int_to_ptr.vmem [resolvable:$true] %s44
      %50 = dma.hbm_to_vmem [thread:$0]  %s3, 4096, %s45, [#allocation6], 64, 64, 4
    $region17: #{tpu_custom_call.1} parent=1 // pred_fallthru
      _
    // Predicated region
    $region18: #{tpu_custom_call.1} parent=1 // pred_check
      _
    $region19: #{tpu_custom_call.1} parent=1 // pred_check_branch
      %52 = sbr.rel (0) target = $region21
    $region20: #{tpu_custom_call.1} parent=1 // pred_region
      _
    $region21: #{tpu_custom_call.1} parent=1 // pred_fallthru
      _
    // Predicated region
    $region22: #{tpu_custom_call.1} parent=1 // pred_check
      _
    $region23: #{tpu_custom_call.1} parent=1 // pred_check_branch
      %54 = sbr.rel (0) target = $region25
    $region24: #{tpu_custom_call.1} parent=1 // pred_region
      %55 = dma.done [#allocation3], 256
    $region25: #{tpu_custom_call.1} parent=1 // pred_fallthru
      _
    // Predicated region
    $region26: #{tpu_custom_call.1} parent=1 // pred_check
      _
    $region27: #{tpu_custom_call.1} parent=1 // pred_check_branch
      %57 = sbr.rel (0) target = $region29
    $region28: #{tpu_custom_call.1} parent=1 // pred_region
      %58 = dma.done [#allocation6], 4096
    $region29: #{tpu_custom_call.1} parent=1 // pred_fallthru
      _
    // Predicated region
    $region30: #{tpu_custom_call.1} parent=1 // pred_check
      _
    $region31: #{tpu_custom_call.1} parent=1 // pred_check_branch
      %60 = sbr.rel (0) target = $region33
    $region32: #{tpu_custom_call.1} parent=1 // pred_region
      %61 = dma.done [#allocation6], 4096
    $region33: #{tpu_custom_call.1} parent=1 // pred_fallthru
      _
    %v63 = vld [vmem:[#allocation2] sm:$0xff]
    %v64 = vld [vmem:[#allocation2 + $0x8] sm:$0xff]
    %v65 = vpack.c.bf16 %v64, %v63
    %v66 = vld [vmem:[#allocation5] sm:$0xff]
    %v67 = vld [vmem:[#allocation5 + $0x10] sm:$0xff]
    %v68 = vld [vmem:[#allocation5 + $0x20] sm:$0xff]
    %v69 = vld [vmem:[#allocation5 + $0x30] sm:$0xff]
    %v70 = vld [vmem:[#allocation5 + $0x40] sm:$0xff]
    %v71 = vld [vmem:[#allocation5 + $0x50] sm:$0xff]
    %v72 = vld [vmem:[#allocation5 + $0x60] sm:$0xff]
    %v73 = vld [vmem:[#allocation5 + $0x70] sm:$0xff]
    %v74 = vld [vmem:[#allocation5 + $0x80] sm:$0xff]
    %v75 = vld [vmem:[#allocation5 + $0x90] sm:$0xff]
    %v76 = vld [vmem:[#allocation5 + $0xa0] sm:$0xff]
    %v77 = vld [vmem:[#allocation5 + $0xb0] sm:$0xff]
    %v78 = vld [vmem:[#allocation5 + $0xc0] sm:$0xff]
    %v79 = vld [vmem:[#allocation5 + $0xd0] sm:$0xff]
    %v80 = vld [vmem:[#allocation5 + $0xe0] sm:$0xff]
    %v81 = vld [vmem:[#allocation5 + $0xf0] sm:$0xff]
    %v82 = vld [vmem:[%s2] sm:$0x3]
    %v84 = vlaneseq
    %v85 = vshrl.u32 %v84, 7
    %v86 = vsub.s32 0, %v85
    %v87 = vrot.slane %v82, %v86
    %v88 = vlaneseq
    %v89 = vshrl.u32 %v88, 7
    %v90 = vsub.s32 1, %v89
    %v91 = vrot.slane %v82, %v90
    %v110 = vunpack.c.l.b16 %v66
    %v111 = vunpack.c.h.b16 %v66
    %v112 = vunpack.c.l.b16 %v67
    %v113 = vunpack.c.h.b16 %v67
    %v114 = vunpack.c.l.b16 %v68
    %v115 = vunpack.c.h.b16 %v68
    %v116 = vunpack.c.l.b16 %v69
    %v117 = vunpack.c.h.b16 %v69
    %v118 = vunpack.c.l.b16 %v70
    %v119 = vunpack.c.h.b16 %v70
    %v120 = vunpack.c.l.b16 %v71
    %v121 = vunpack.c.h.b16 %v71
    %v122 = vunpack.c.l.b16 %v72
    %v123 = vunpack.c.h.b16 %v72
    %v124 = vunpack.c.l.b16 %v73
    %v125 = vunpack.c.h.b16 %v73
    %v126 = vunpack.c.l.b16 %v74
    %v127 = vunpack.c.h.b16 %v74
    %v128 = vunpack.c.l.b16 %v75
    %v129 = vunpack.c.h.b16 %v75
    %v130 = vunpack.c.l.b16 %v76
    %v131 = vunpack.c.h.b16 %v76
    %v132 = vunpack.c.l.b16 %v77
    %v133 = vunpack.c.h.b16 %v77
    %v134 = vunpack.c.l.b16 %v78
    %v135 = vunpack.c.h.b16 %v78
    %v136 = vunpack.c.l.b16 %v79
    %v137 = vunpack.c.h.b16 %v79
    %v138 = vunpack.c.l.b16 %v80
    %v139 = vunpack.c.h.b16 %v80
    %v140 = vunpack.c.l.b16 %v81
    %v141 = vunpack.c.h.b16 %v81
    %v142 = vpack.c.b16 %v112, %v110
    %v143 = vpack.c.b16 %v113, %v111
    %v144 = vpack.c.b16 %v116, %v114
    %v145 = vpack.c.b16 %v117, %v115
    %v146 = vpack.c.b16 %v120, %v118
    %v147 = vpack.c.b16 %v121, %v119
    %v148 = vpack.c.b16 %v124, %v122
    %v149 = vpack.c.b16 %v125, %v123
    %v150 = vpack.c.b16 %v128, %v126
    %v151 = vpack.c.b16 %v129, %v127
    %v152 = vpack.c.b16 %v132, %v130
    %v153 = vpack.c.b16 %v133, %v131
    %v154 = vpack.c.b16 %v136, %v134
    %v155 = vpack.c.b16 %v137, %v135
    %v156 = vpack.c.b16 %v140, %v138
    %v157 = vpack.c.b16 %v141, %v139
    %174 = vmatprep.subr.bf16.mxu0 %v143
    %175 = vmatpush1.bf16.msra.mxu0 %v142
    %176 = vmatprep.subr.bf16.mxu0 %v145
    %177 = vmatpush1.bf16.msra.mxu0 %v144
    %178 = vmatprep.subr.bf16.mxu0 %v147
    %179 = vmatpush1.bf16.msra.mxu0 %v146
    %180 = vmatprep.subr.bf16.mxu0 %v149
    %181 = vmatpush1.bf16.msra.mxu0 %v148
    %182 = vmatprep.subr.bf16.mxu0 %v151
    %183 = vmatpush1.bf16.msra.mxu0 %v150
    %184 = vmatprep.subr.bf16.mxu0 %v153
    %185 = vmatpush1.bf16.msra.mxu0 %v152
    %186 = vmatprep.subr.bf16.mxu0 %v155
    %187 = vmatpush1.bf16.msra.mxu0 %v154
    %188 = vmatprep.subr.bf16.mxu0 %v157
    %189 = vmatpush1.bf16.msra.mxu0 %v156
    %190 = vmatprep.subr.bf16.mxu0 0
    %191 = vmatpush1.bf16.msra.mxu0 0
    %192 = vmatprep.subr.bf16.mxu0 0
    %193 = vmatpush1.bf16.msra.mxu0 0
    %194 = vmatprep.subr.bf16.mxu0 0
    %195 = vmatpush1.bf16.msra.mxu0 0
    %196 = vmatprep.subr.bf16.mxu0 0
    %197 = vmatpush1.bf16.msra.mxu0 0
    %198 = vmatprep.subr.bf16.mxu0 0
    %199 = vmatpush1.bf16.msra.mxu0 0
    %200 = vmatprep.subr.bf16.mxu0 0
    %201 = vmatpush1.bf16.msra.mxu0 0
    %202 = vmatprep.subr.bf16.mxu0 0
    %203 = vmatpush1.bf16.msra.mxu0 0
    %204 = vmatprep.subr.bf16.mxu0 0
    %205 = vmatpush1.bf16.msra.mxu0 0
    %206 = vmatprep.mubr.bf16.mxu0 0
    %207 = vmatmul.mubr.bf16.gmra.mrb[0].mxu0 %v65
    %v208 = vpop.f32.mrb[0].mxu0
    %v209 = vadd.f32 %v87, %v208
    %v210 = vpop.f32.mrb[0].mxu0
    %v211 = vadd.f32 %v91, %v210
    %v212 = vpop.f32.mrb[0].mxu0
    %v213 = vadd.f32 %v87, %v212
    %v214 = vpop.f32.mrb[0].mxu0
    %v215 = vadd.f32 %v91, %v214
    %216 = vdwg.mxu0
    %v217 = vmax.f32 %v209, 0.0
    %v218 = vmax.f32 %v211, 0.0
    %v219 = vmax.f32 %v213, 0.0
    %v220 = vmax.f32 %v215, 0.0
    %v221 = vld [vmem:[#allocation7] sm:$0xf]
    %v222 = vld [vmem:[#allocation7 + $0x4] sm:$0xf]
    %v223 = vld [vmem:[#allocation7 + $0x8] sm:$0xf]
    %v224 = vld [vmem:[#allocation7 + $0xc] sm:$0xf]
    %v225 = vld [vmem:[#allocation7 + $0x10] sm:$0xf]
    %v226 = vld [vmem:[#allocation7 + $0x14] sm:$0xf]
    %v227 = vld [vmem:[#allocation7 + $0x18] sm:$0xf]
    %v228 = vld [vmem:[#allocation7 + $0x1c] sm:$0xf]
    %v229 = vld [vmem:[#allocation7 + $0x20] sm:$0xf]
    %v230 = vld [vmem:[#allocation7 + $0x24] sm:$0xf]
    %v231 = vld [vmem:[#allocation7 + $0x28] sm:$0xf]
    %v232 = vld [vmem:[#allocation7 + $0x2c] sm:$0xf]
    %v233 = vld [vmem:[#allocation7 + $0x30] sm:$0xf]
    %v234 = vld [vmem:[#allocation7 + $0x34] sm:$0xf]
    %v235 = vld [vmem:[#allocation7 + $0x38] sm:$0xf]
    %v236 = vld [vmem:[#allocation7 + $0x3c] sm:$0xf]
    %v237 = vld [vmem:[#allocation7 + $0x40] sm:$0xf]
    %v238 = vld [vmem:[#allocation7 + $0x44] sm:$0xf]
    %v239 = vld [vmem:[#allocation7 + $0x48] sm:$0xf]
    %v240 = vld [vmem:[#allocation7 + $0x4c] sm:$0xf]
    %v241 = vld [vmem:[#allocation7 + $0x50] sm:$0xf]
    %v242 = vld [vmem:[#allocation7 + $0x54] sm:$0xf]
    %v243 = vld [vmem:[#allocation7 + $0x58] sm:$0xf]
    %v244 = vld [vmem:[#allocation7 + $0x5c] sm:$0xf]
    %v245 = vld [vmem:[#allocation7 + $0x60] sm:$0xf]
    %v246 = vld [vmem:[#allocation7 + $0x64] sm:$0xf]
    %v247 = vld [vmem:[#allocation7 + $0x68] sm:$0xf]
    %v248 = vld [vmem:[#allocation7 + $0x6c] sm:$0xf]
    %v249 = vld [vmem:[#allocation7 + $0x70] sm:$0xf]
    %v250 = vld [vmem:[#allocation7 + $0x74] sm:$0xf]
    %v251 = vld [vmem:[#allocation7 + $0x78] sm:$0xf]
    %v252 = vld [vmem:[#allocation7 + $0x7c] sm:$0xf]
    %v253 = vpack.c.bf16 %v219, %v217
    %v254 = vpack.c.bf16 %v220, %v218
    %v255 = vld [vmem:[#allocation5 + $0x8] sm:$0xff]
    %v256 = vld [vmem:[#allocation5 + $0x18] sm:$0xff]
    %v257 = vld [vmem:[#allocation5 + $0x28] sm:$0xff]
    %v258 = vld [vmem:[#allocation5 + $0x38] sm:$0xff]
    %v259 = vld [vmem:[#allocation5 + $0x48] sm:$0xff]
    %v260 = vld [vmem:[#allocation5 + $0x58] sm:$0xff]
    %v261 = vld [vmem:[#allocation5 + $0x68] sm:$0xff]
    %v262 = vld [vmem:[#allocation5 + $0x78] sm:$0xff]
    %v263 = vld [vmem:[#allocation5 + $0x88] sm:$0xff]
    %v264 = vld [vmem:[#allocation5 + $0x98] sm:$0xff]
    %v265 = vld [vmem:[#allocation5 + $0xa8] sm:$0xff]
    %v266 = vld [vmem:[#allocation5 + $0xb8] sm:$0xff]
    %v267 = vld [vmem:[#allocation5 + $0xc8] sm:$0xff]
    %v268 = vld [vmem:[#allocation5 + $0xd8] sm:$0xff]
    %v269 = vld [vmem:[#allocation5 + $0xe8] sm:$0xff]
    %v270 = vld [vmem:[#allocation5 + $0xf8] sm:$0xff]
    %v271 = vld [vmem:[%s2 + $0x2] sm:$0x3]
    %v273 = vlaneseq
    %v274 = vshrl.u32 %v273, 7
    %v275 = vsub.s32 0, %v274
    %v276 = vrot.slane %v271, %v275
    %v277 = vlaneseq
    %v278 = vshrl.u32 %v277, 7
    %v279 = vsub.s32 1, %v278
    %v280 = vrot.slane %v271, %v279
    %v299 = vunpack.c.l.b16 %v255
    %v300 = vunpack.c.h.b16 %v255
    %v301 = vunpack.c.l.b16 %v256
    %v302 = vunpack.c.h.b16 %v256
    %v303 = vunpack.c.l.b16 %v257
    %v304 = vunpack.c.h.b16 %v257
    %v305 = vunpack.c.l.b16 %v258
    %v306 = vunpack.c.h.b16 %v258
    %v307 = vunpack.c.l.b16 %v259
    %v308 = vunpack.c.h.b16 %v259
    %v309 = vunpack.c.l.b16 %v260
    %v310 = vunpack.c.h.b16 %v260
    %v311 = vunpack.c.l.b16 %v261
    %v312 = vunpack.c.h.b16 %v261
    %v313 = vunpack.c.l.b16 %v262
    %v314 = vunpack.c.h.b16 %v262
    %v315 = vunpack.c.l.b16 %v263
    %v316 = vunpack.c.h.b16 %v263
    %v317 = vunpack.c.l.b16 %v264
    %v318 = vunpack.c.h.b16 %v264
    %v319 = vunpack.c.l.b16 %v265
    %v320 = vunpack.c.h.b16 %v265
    %v321 = vunpack.c.l.b16 %v266
    %v322 = vunpack.c.h.b16 %v266
    %v323 = vunpack.c.l.b16 %v267
    %v324 = vunpack.c.h.b16 %v267
    %v325 = vunpack.c.l.b16 %v268
    %v326 = vunpack.c.h.b16 %v268
    %v327 = vunpack.c.l.b16 %v269
    %v328 = vunpack.c.h.b16 %v269
    %v329 = vunpack.c.l.b16 %v270
    %v330 = vunpack.c.h.b16 %v270
    %v331 = vpack.c.b16 %v301, %v299
    %v332 = vpack.c.b16 %v302, %v300
    %v333 = vpack.c.b16 %v305, %v303
    %v334 = vpack.c.b16 %v306, %v304
    %v335 = vpack.c.b16 %v309, %v307
    %v336 = vpack.c.b16 %v310, %v308
    %v337 = vpack.c.b16 %v313, %v311
    %v338 = vpack.c.b16 %v314, %v312
    %v339 = vpack.c.b16 %v317, %v315
    %v340 = vpack.c.b16 %v318, %v316
    %v341 = vpack.c.b16 %v321, %v319
    %v342 = vpack.c.b16 %v322, %v320
    %v343 = vpack.c.b16 %v325, %v323
    %v344 = vpack.c.b16 %v326, %v324
    %v345 = vpack.c.b16 %v329, %v327
    %v346 = vpack.c.b16 %v330, %v328
    %363 = vmatprep.subr.bf16.mxu0 %v332
    %364 = vmatpush1.bf16.msra.mxu0 %v331
    %365 = vmatprep.subr.bf16.mxu0 %v334
    %366 = vmatpush1.bf16.msra.mxu0 %v333
    %367 = vmatprep.subr.bf16.mxu0 %v336
    %368 = vmatpush1.bf16.msra.mxu0 %v335
    %369 = vmatprep.subr.bf16.mxu0 %v338
    %370 = vmatpush1.bf16.msra.mxu0 %v337
    %371 = vmatprep.subr.bf16.mxu0 %v340
    %372 = vmatpush1.bf16.msra.mxu0 %v339
    %373 = vmatprep.subr.bf16.mxu0 %v342
    %374 = vmatpush1.bf16.msra.mxu0 %v341
    %375 = vmatprep.subr.bf16.mxu0 %v344
    %376 = vmatpush1.bf16.msra.mxu0 %v343
    %377 = vmatprep.subr.bf16.mxu0 %v346
    %378 = vmatpush1.bf16.msra.mxu0 %v345
    %379 = vmatprep.subr.bf16.mxu0 0
    %380 = vmatpush1.bf16.msra.mxu0 0
    %381 = vmatprep.subr.bf16.mxu0 0
    %382 = vmatpush1.bf16.msra.mxu0 0
    %383 = vmatprep.subr.bf16.mxu0 0
    %384 = vmatpush1.bf16.msra.mxu0 0
    %385 = vmatprep.subr.bf16.mxu0 0
    %386 = vmatpush1.bf16.msra.mxu0 0
    %387 = vmatprep.subr.bf16.mxu0 0
    %388 = vmatpush1.bf16.msra.mxu0 0
    %389 = vmatprep.subr.bf16.mxu0 0
    %390 = vmatpush1.bf16.msra.mxu0 0
    %391 = vmatprep.subr.bf16.mxu0 0
    %392 = vmatpush1.bf16.msra.mxu0 0
    %393 = vmatprep.subr.bf16.mxu0 0
    %394 = vmatpush1.bf16.msra.mxu0 0
    %395 = vmatprep.mubr.bf16.mxu0 0
    %396 = vmatmul.mubr.bf16.gmra.mrb[0].mxu0 %v65
    %v397 = vpop.f32.mrb[0].mxu0
    %v398 = vadd.f32 %v276, %v397
    %v399 = vpop.f32.mrb[0].mxu0
    %v400 = vadd.f32 %v280, %v399
    %v401 = vpop.f32.mrb[0].mxu0
    %v402 = vadd.f32 %v276, %v401
    %v403 = vpop.f32.mrb[0].mxu0
    %v404 = vadd.f32 %v280, %v403
    %405 = vdwg.mxu0
    %v406 = vmax.f32 %v398, 0.0
    %v407 = vmax.f32 %v400, 0.0
    %v408 = vmax.f32 %v402, 0.0
    %v409 = vmax.f32 %v404, 0.0
    %v410 = vld [vmem:[#allocation7 + $0x80] sm:$0xf]
    %v411 = vld [vmem:[#allocation7 + $0x84] sm:$0xf]
    %v412 = vld [vmem:[#allocation7 + $0x88] sm:$0xf]
    %v413 = vld [vmem:[#allocation7 + $0x8c] sm:$0xf]
    %v414 = vld [vmem:[#allocation7 + $0x90] sm:$0xf]
    %v415 = vld [vmem:[#allocation7 + $0x94] sm:$0xf]
    %v416 = vld [vmem:[#allocation7 + $0x98] sm:$0xf]
    %v417 = vld [vmem:[#allocation7 + $0x9c] sm:$0xf]
    %v418 = vld [vmem:[#allocation7 + $0xa0] sm:$0xf]
    %v419 = vld [vmem:[#allocation7 + $0xa4] sm:$0xf]
    %v420 = vld [vmem:[#allocation7 + $0xa8] sm:$0xf]
    %v421 = vld [vmem:[#allocation7 + $0xac] sm:$0xf]
    %v422 = vld [vmem:[#allocation7 + $0xb0] sm:$0xf]
    %v423 = vld [vmem:[#allocation7 + $0xb4] sm:$0xf]
    %v424 = vld [vmem:[#allocation7 + $0xb8] sm:$0xf]
    %v425 = vld [vmem:[#allocation7 + $0xbc] sm:$0xf]
    %v426 = vld [vmem:[#allocation7 + $0xc0] sm:$0xf]
    %v427 = vld [vmem:[#allocation7 + $0xc4] sm:$0xf]
    %v428 = vld [vmem:[#allocation7 + $0xc8] sm:$0xf]
    %v429 = vld [vmem:[#allocation7 + $0xcc] sm:$0xf]
    %v430 = vld [vmem:[#allocation7 + $0xd0] sm:$0xf]
    %v431 = vld [vmem:[#allocation7 + $0xd4] sm:$0xf]
    %v432 = vld [vmem:[#allocation7 + $0xd8] sm:$0xf]
    %v433 = vld [vmem:[#allocation7 + $0xdc] sm:$0xf]
    %v434 = vld [vmem:[#allocation7 + $0xe0] sm:$0xf]
    %v435 = vld [vmem:[#allocation7 + $0xe4] sm:$0xf]
    %v436 = vld [vmem:[#allocation7 + $0xe8] sm:$0xf]
    %v437 = vld [vmem:[#allocation7 + $0xec] sm:$0xf]
    %v438 = vld [vmem:[#allocation7 + $0xf0] sm:$0xf]
    %v439 = vld [vmem:[#allocation7 + $0xf4] sm:$0xf]
    %v440 = vld [vmem:[#allocation7 + $0xf8] sm:$0xf]
    %v441 = vld [vmem:[#allocation7 + $0xfc] sm:$0xf]
    %v442 = vpack.c.bf16 %v408, %v406
    %v443 = vpack.c.bf16 %v409, %v407
    %v476 = vunpack.c.l.b16 %v410
    %v477 = vunpack.c.l.b16 %v411
    %v478 = vunpack.c.l.b16 %v412
    %v479 = vunpack.c.l.b16 %v413
    %v480 = vunpack.c.l.b16 %v414
    %v481 = vunpack.c.l.b16 %v415
    %v482 = vunpack.c.l.b16 %v416
    %v483 = vunpack.c.l.b16 %v417
    %v484 = vunpack.c.l.b16 %v418
    %v485 = vunpack.c.l.b16 %v419
    %v486 = vunpack.c.l.b16 %v420
    %v487 = vunpack.c.l.b16 %v421
    %v488 = vunpack.c.l.b16 %v422
    %v489 = vunpack.c.l.b16 %v423
    %v490 = vunpack.c.l.b16 %v424
    %v491 = vunpack.c.l.b16 %v425
    %v492 = vunpack.c.l.b16 %v426
    %v493 = vunpack.c.l.b16 %v427
    %v494 = vunpack.c.l.b16 %v428
    %v495 = vunpack.c.l.b16 %v429
    %v496 = vunpack.c.l.b16 %v430
    %v497 = vunpack.c.l.b16 %v431
    %v498 = vunpack.c.l.b16 %v432
    %v499 = vunpack.c.l.b16 %v433
    %v500 = vunpack.c.l.b16 %v434
    %v501 = vunpack.c.l.b16 %v435
    %v502 = vunpack.c.l.b16 %v436
    %v503 = vunpack.c.l.b16 %v437
    %v504 = vunpack.c.l.b16 %v438
    %v505 = vunpack.c.l.b16 %v439
    %v506 = vunpack.c.l.b16 %v440
    %v507 = vunpack.c.l.b16 %v441
    %v508 = vpack.c.b16 %v477, %v476
    %v509 = vpack.c.b16 %v479, %v478
    %v510 = vpack.c.b16 %v481, %v480
    %v511 = vpack.c.b16 %v483, %v482
    %v512 = vpack.c.b16 %v485, %v484
    %v513 = vpack.c.b16 %v487, %v486
    %v514 = vpack.c.b16 %v489, %v488
    %v515 = vpack.c.b16 %v491, %v490
    %v516 = vpack.c.b16 %v493, %v492
    %v517 = vpack.c.b16 %v495, %v494
    %v518 = vpack.c.b16 %v497, %v496
    %v519 = vpack.c.b16 %v499, %v498
    %v520 = vpack.c.b16 %v501, %v500
    %v521 = vpack.c.b16 %v503, %v502
    %v522 = vpack.c.b16 %v505, %v504
    %v523 = vpack.c.b16 %v507, %v506
    %540 = vmatprep.subr.bf16.mxu0 0
    %541 = vmatpush1.bf16.msra.mxu0 %v508
    %542 = vmatprep.subr.bf16.mxu0 0
    %543 = vmatpush1.bf16.msra.mxu0 %v509
    %544 = vmatprep.subr.bf16.mxu0 0
    %545 = vmatpush1.bf16.msra.mxu0 %v510
    %546 = vmatprep.subr.bf16.mxu0 0
    %547 = vmatpush1.bf16.msra.mxu0 %v511
    %548 = vmatprep.subr.bf16.mxu0 0
    %549 = vmatpush1.bf16.msra.mxu0 %v512
    %550 = vmatprep.subr.bf16.mxu0 0
    %551 = vmatpush1.bf16.msra.mxu0 %v513
    %552 = vmatprep.subr.bf16.mxu0 0
    %553 = vmatpush1.bf16.msra.mxu0 %v514
    %554 = vmatprep.subr.bf16.mxu0 0
    %555 = vmatpush1.bf16.msra.mxu0 %v515
    %556 = vmatprep.subr.bf16.mxu0 0
    %557 = vmatpush1.bf16.msra.mxu0 %v516
    %558 = vmatprep.subr.bf16.mxu0 0
    %559 = vmatpush1.bf16.msra.mxu0 %v517
    %560 = vmatprep.subr.bf16.mxu0 0
    %561 = vmatpush1.bf16.msra.mxu0 %v518
    %562 = vmatprep.subr.bf16.mxu0 0
    %563 = vmatpush1.bf16.msra.mxu0 %v519
    %564 = vmatprep.subr.bf16.mxu0 0
    %565 = vmatpush1.bf16.msra.mxu0 %v520
    %566 = vmatprep.subr.bf16.mxu0 0
    %567 = vmatpush1.bf16.msra.mxu0 %v521
    %568 = vmatprep.subr.bf16.mxu0 0
    %569 = vmatpush1.bf16.msra.mxu0 %v522
    %570 = vmatprep.subr.bf16.mxu0 0
    %571 = vmatpush1.bf16.msra.mxu0 %v523
    %572 = vmatprep.mubr.bf16.mxu0 %v443
    %573 = vmatmul.mubr.bf16.gmra.mrb[0].mxu0 %v442
    %v574 = vpop.f32.mrb[0].mxu0
    %v575 = vadd.f32 0.0, %v574
    %v576 = vpop.f32.mrb[0].mxu0
    %v577 = vpop.f32.mrb[0].mxu0
    %v578 = vadd.f32 0.0, %v577
    %v579 = vpop.f32.mrb[0].mxu0
    %580 = vdwg.mxu0
    %v613 = vunpack.c.l.b16 %v221
    %v614 = vunpack.c.l.b16 %v222
    %v615 = vunpack.c.l.b16 %v223
    %v616 = vunpack.c.l.b16 %v224
    %v617 = vunpack.c.l.b16 %v225
    %v618 = vunpack.c.l.b16 %v226
    %v619 = vunpack.c.l.b16 %v227
    %v620 = vunpack.c.l.b16 %v228
    %v621 = vunpack.c.l.b16 %v229
    %v622 = vunpack.c.l.b16 %v230
    %v623 = vunpack.c.l.b16 %v231
    %v624 = vunpack.c.l.b16 %v232
    %v625 = vunpack.c.l.b16 %v233
    %v626 = vunpack.c.l.b16 %v234
    %v627 = vunpack.c.l.b16 %v235
    %v628 = vunpack.c.l.b16 %v236
    %v629 = vunpack.c.l.b16 %v237
    %v630 = vunpack.c.l.b16 %v238
    %v631 = vunpack.c.l.b16 %v239
    %v632 = vunpack.c.l.b16 %v240
    %v633 = vunpack.c.l.b16 %v241
    %v634 = vunpack.c.l.b16 %v242
    %v635 = vunpack.c.l.b16 %v243
    %v636 = vunpack.c.l.b16 %v244
    %v637 = vunpack.c.l.b16 %v245
    %v638 = vunpack.c.l.b16 %v246
    %v639 = vunpack.c.l.b16 %v247
    %v640 = vunpack.c.l.b16 %v248
    %v641 = vunpack.c.l.b16 %v249
    %v642 = vunpack.c.l.b16 %v250
    %v643 = vunpack.c.l.b16 %v251
    %v644 = vunpack.c.l.b16 %v252
    %v645 = vpack.c.b16 %v614, %v613
    %v646 = vpack.c.b16 %v616, %v615
    %v647 = vpack.c.b16 %v618, %v617
    %v648 = vpack.c.b16 %v620, %v619
    %v649 = vpack.c.b16 %v622, %v621
    %v650 = vpack.c.b16 %v624, %v623
    %v651 = vpack.c.b16 %v626, %v625
    %v652 = vpack.c.b16 %v628, %v627
    %v653 = vpack.c.b16 %v630, %v629
    %v654 = vpack.c.b16 %v632, %v631
    %v655 = vpack.c.b16 %v634, %v633
    %v656 = vpack.c.b16 %v636, %v635
    %v657 = vpack.c.b16 %v638, %v637
    %v658 = vpack.c.b16 %v640, %v639
    %v659 = vpack.c.b16 %v642, %v641
    %v660 = vpack.c.b16 %v644, %v643
    %677 = vmatprep.subr.bf16.mxu0 0
    %678 = vmatpush1.bf16.msra.mxu0 %v645
    %679 = vmatprep.subr.bf16.mxu0 0
    %680 = vmatpush1.bf16.msra.mxu0 %v646
    %681 = vmatprep.subr.bf16.mxu0 0
    %682 = vmatpush1.bf16.msra.mxu0 %v647
    %683 = vmatprep.subr.bf16.mxu0 0
    %684 = vmatpush1.bf16.msra.mxu0 %v648
    %685 = vmatprep.subr.bf16.mxu0 0
    %686 = vmatpush1.bf16.msra.mxu0 %v649
    %687 = vmatprep.subr.bf16.mxu0 0
    %688 = vmatpush1.bf16.msra.mxu0 %v650
    %689 = vmatprep.subr.bf16.mxu0 0
    %690 = vmatpush1.bf16.msra.mxu0 %v651
    %691 = vmatprep.subr.bf16.mxu0 0
    %692 = vmatpush1.bf16.msra.mxu0 %v652
    %693 = vmatprep.subr.bf16.mxu0 0
    %694 = vmatpush1.bf16.msra.mxu0 %v653
    %695 = vmatprep.subr.bf16.mxu0 0
    %696 = vmatpush1.bf16.msra.mxu0 %v654
    %697 = vmatprep.subr.bf16.mxu0 0
    %698 = vmatpush1.bf16.msra.mxu0 %v655
    %699 = vmatprep.subr.bf16.mxu0 0
    %700 = vmatpush1.bf16.msra.mxu0 %v656
    %701 = vmatprep.subr.bf16.mxu0 0
    %702 = vmatpush1.bf16.msra.mxu0 %v657
    %703 = vmatprep.subr.bf16.mxu0 0
    %704 = vmatpush1.bf16.msra.mxu0 %v658
    %705 = vmatprep.subr.bf16.mxu0 0
    %706 = vmatpush1.bf16.msra.mxu0 %v659
    %707 = vmatprep.subr.bf16.mxu0 0
    %708 = vmatpush1.bf16.msra.mxu0 %v660
    %709 = vmatprep.mubr.bf16.mxu0 %v254
    %710 = vmatmul.mubr.bf16.gmra.mrb[0].mxu0 %v253
    %v711 = vpop.f32.mrb[0].mxu0
    %v712 = vadd.f32 %v575, %v711
    %v713 = vpop.f32.mrb[0].mxu0
    %v714 = vpop.f32.mrb[0].mxu0
    %v715 = vadd.f32 %v578, %v714
    %v716 = vpop.f32.mrb[0].mxu0
    %717 = vdwg.mxu0
    %v718 = vld [vmem:[%s4] sm:$0x1]
    %v720 = vlaneseq
    %v721 = vshrl.u32 %v720, 7
    %v722 = vsub.s32 0, %v721
    %v723 = vrot.slane %v718, %v722
    %v725 = vadd.f32 %v712, %v723
    %v726 = vadd.f32 %v715, %v723
    %727 = vst [vmem:[#allocation8] sm:$0xff] %v725
    %728 = vst [vmem:[#allocation8 + $0x8] sm:$0xff] %v726
    // Predicated region
    $region34: #{tpu_custom_call.1} parent=1 // pred_check
      _
    $region35: #{tpu_custom_call.1} parent=1 // pred_check_branch
      %730 = sbr.rel (0) target = $region37
    $region36: #{tpu_custom_call.1} parent=1 // pred_region
      %s732 = ssub.s32 256, 256
      %733 = vsyncadd [#allocation4], %s732
      %s734 = sshll.u32 [#allocation8], 4
      %s735 = int_to_ptr.vmem [resolvable:$true] %s734
      %740 = dma.vmem_to_hbm [thread:$0]  %s735, 256, %s5, [#allocation4], 128, 128, 8
    $region37: #{tpu_custom_call.1} parent=1 // pred_fallthru
      _
    // Predicated region
    $region38: #{tpu_custom_call.1} parent=1 // pred_check
      _
    $region39: #{tpu_custom_call.1} parent=1 // pred_check_branch
      %742 = sbr.rel (0) target = $region41
    $region40: #{tpu_custom_call.1} parent=1 // pred_region
      %743 = dma.done [#allocation4], 256
    $region41: #{tpu_custom_call.1} parent=1 // pred_fallthru
      _
    %744 = vsyncpa [#allocation3], 1
    %745 = vsyncpa [#allocation6], 1
    %746 = vsyncpa [#allocation4], 1

</llo_original>
